<compile_context>
chip_gen: v6e
topology: v6e:2x2x1
jax: 0.10.0
libtpu: 0.0.40
codegen_flags: <defaults>
</compile_context>

<pallas_src>
import jax
import jax.numpy as jnp
from jax import lax
from jax.experimental import pallas as pl
from jax.experimental.pallas import tpu as pltpu

_EPS = 1e-12
_LANES = 128


# ------------------------- parameter setup (init-time glue) ----------------

def kaiming_uniform(key, out_features, in_features):
    # matches torch.nn.init.kaiming_uniform_(weight) defaults (gain = sqrt(2))
    gain = jnp.sqrt(2.0)
    bound = jnp.sqrt(3.0) * gain / jnp.sqrt(jnp.float32(in_features))
    return jax.random.uniform(
        key, (out_features, in_features), jnp.float32, minval=-bound, maxval=bound
    )


def _round8(n):
    return -(-n // 8) * 8


def pack_params(wts, us):
    """Pack pre-transposed weights W^T [in,out] and u rows [1,out] into one slab.

    Layout (f32[rows, 128], every section start 8-sublane aligned):
      rows [row_start_i : row_start_i + in_i], lanes [0:out_i]  -> W_i^T
      row  [u_start + i],                      lanes [0:out_i]  -> u_i
    Zero padding elsewhere.
    """
    row_starts, r = [], 0
    for wt in wts:
        row_starts.append(r)
        r += _round8(wt.shape[0])
    u_start = r
    r += _round8(len(us))

    slab = jnp.zeros((r, _LANES), jnp.float32)
    for wt, rs in zip(wts, row_starts):
        slab = slab.at[rs:rs + wt.shape[0], :wt.shape[1]].set(wt)
    for i, u in enumerate(us):
        slab = slab.at[u_start + i:u_start + i + 1, :u.shape[1]].set(u)

    layout = {
        "row_starts": tuple(int(s) for s in row_starts),
        "u_start": int(u_start),
        "dims": tuple((int(wt.shape[0]), int(wt.shape[1])) for wt in wts),
    }
    return slab, layout


# ----------------------------- Pallas kernel -------------------------------

def _inv_sigma(wt, u_row):
    """1/sigma of one PyTorch-style spectral-norm power-iteration step.

    wt:    [in, out]  (= W^T)
    u_row: [1, out]   (pre-normalized `u` buffer)
    With u normalized, sigma = ||W W^T u|| / ||W^T u||.
    Elementwise mul + lane/sublane reductions + one EUP rsqrt; no tiny matmuls,
    no divides.
    """
    p = jnp.sum(wt * u_row, axis=1, keepdims=True)   # [in, 1]  = W^T u
    q = jnp.sum(wt * p, axis=0, keepdims=True)       # [1, out] = W (W^T u)
    p2 = jnp.sum(p * p, axis=0, keepdims=True)       # [1, 1]
    q2 = jnp.sum(q * q, axis=1, keepdims=True)       # [1, 1]
    return lax.rsqrt(q2 / jnp.maximum(p2, _EPS))
    # TODO(synk): PyTorch updates the persistent `u` buffer in-place each
    # training-mode forward; that stateful side effect is not carried across
    # calls here (single-forward / eval semantics are identical).


def make_kernel(layout):
    row_starts = layout["row_starts"]
    dims = layout["dims"]
    u_start = layout["u_start"]

    def kernel(x_ref, p_ref, o_ref):
        ws, inv_all = [], None
        for i, (rs, (din, dout)) in enumerate(zip(row_starts, dims)):
            w = p_ref[rs:rs + din, 0:dout]                       # [in, out]
            u = p_ref[u_start + i:u_start + i + 1, 0:dout]       # [1, out]
            inv = _inv_sigma(w, u)
            inv_all = inv if inv_all is None else inv_all * inv
            ws.append(w)

        # ReLU is positively homogeneous and every sigma > 0, so all 1/sigma
        # scales are applied as one multiply at the end of the dot chain.
        h = x_ref[...]
        for w in ws[:-1]:
            h = jnp.maximum(
                jnp.dot(h, w, preferred_element_type=jnp.float32), 0.0)
        out = jnp.dot(h, ws[-1], preferred_element_type=jnp.float32) * inv_all
        o_ref[...] = out.astype(o_ref.dtype)

    return kernel


def build_forward(layout):
    kernel = make_kernel(layout)
    out_features = layout["dims"][-1][1]

    @jax.jit
    def fwd(x, slab):
        return pl.pallas_call(
            kernel,
            out_shape=jax.ShapeDtypeStruct((x.shape[0], out_features), x.dtype),
            in_specs=[pl.BlockSpec(memory_space=pltpu.VMEM),
                      pl.BlockSpec(memory_space=pltpu.VMEM)],
            out_specs=pl.BlockSpec(memory_space=pltpu.VMEM),
        )(x, slab)

    return fwd


# --------------------------------- main -------------------------------------

if __name__ == "__main__":
    input_size, num_layer, hidden_size = 5, 4, 20
    batch = 8

    key = jax.random.PRNGKey(0)
    keys = jax.random.split(key, 16)

    # layer dims: 5->20, 20->20, 20->20, 20->1
    dims = [(hidden_size, input_size)]
    for _ in range(num_layer - 2):
        dims.append((hidden_size, hidden_size))
    dims.append((1, hidden_size))

    weights = [kaiming_uniform(keys[i], of, inf) for i, (of, inf) in enumerate(dims)]

    # spectral_norm u buffers: ~N(0,1), normalized, stored as [1, out] rows
    us = []
    for i, w in enumerate(weights):
        u0 = jax.random.normal(keys[8 + i], (1, w.shape[0]), jnp.float32)
        u0 = u0 / jnp.maximum(jnp.linalg.norm(u0), _EPS)
        us.append(u0)

    # One-time pre-transpose to [in, out] and pack everything into one slab.
    wts = [w.T for w in weights]
    slab, layout = pack_params(wts, us)
    forward = build_forward(layout)

    x = jax.random.normal(keys[15], (batch, input_size), jnp.float32)

    out = jax.block_until_ready(forward(x, slab))

    # ------------------- pure-JAX reference (PyTorch semantics) -------------
    def spectral_normalize(w, u_row):
        u = u_row[0]
        v = w.T @ u
        v = v / jnp.maximum(jnp.linalg.norm(v), _EPS)
        u_new = w @ v
        u_new = u_new / jnp.maximum(jnp.linalg.norm(u_new), _EPS)
        sigma = u_new @ (w @ v)
        return w / sigma

    wsn = [spectral_normalize(w, u) for w, u in zip(weights, us)]
    h = x
    for w in wsn[:-1]:
        h = jnp.maximum(h @ w.T, 0.0)
    ref = h @ wsn[-1].T

    assert out.shape == (batch, 1)
    assert jnp.allclose(out, ref, atol=1e-5, rtol=1e-5)

    print("KERNEL_OK")
</pallas_src>

<mosaic_0001>
module attributes {stable_mosaic.version = 11 : i64} {
  func.func @kernel(%arg0: memref<8x5xf32, #tpu.memory_space<vmem>>, %arg1: memref<88x128xf32, #tpu.memory_space<vmem>>, %arg2: memref<8x1xf32, #tpu.memory_space<vmem>>) attributes {dimension_semantics = [], scalar_prefetch = 0 : i64, scratch_operands = 0 : i64, tpu.core_type = #tpu.core_type<tc>} {
    %c0 = arith.constant 0 : index
    %c0_0 = arith.constant 0 : index
    %0 = vector.load %arg1[%c0, %c0_0] : memref<88x128xf32, #tpu.memory_space<vmem>>, vector<5x20xf32>
    %c80 = arith.constant 80 : index
    %c0_1 = arith.constant 0 : index
    %1 = vector.load %arg1[%c80, %c0_1] : memref<88x128xf32, #tpu.memory_space<vmem>>, vector<1x20xf32>
    %2 = vector.broadcast %1 : vector<1x20xf32> to vector<5x20xf32>
    %3 = arith.mulf %0, %2 : vector<5x20xf32>
    %cst = arith.constant dense<0.000000e+00> : vector<5xf32>
    %4 = vector.multi_reduction <add>, %3, %cst [1] : vector<5x20xf32> to vector<5xf32>
    %5 = vector.shape_cast %4 : vector<5xf32> to vector<5x1xf32>
    %6 = vector.broadcast %5 : vector<5x1xf32> to vector<5x20xf32>
    %7 = arith.mulf %0, %6 : vector<5x20xf32>
    %cst_2 = arith.constant dense<0.000000e+00> : vector<20xf32>
    %8 = vector.multi_reduction <add>, %7, %cst_2 [0] : vector<5x20xf32> to vector<20xf32>
    %9 = vector.shape_cast %8 : vector<20xf32> to vector<1x20xf32>
    %10 = arith.mulf %5, %5 : vector<5x1xf32>
    %cst_3 = arith.constant dense<0.000000e+00> : vector<1xf32>
    %11 = vector.multi_reduction <add>, %10, %cst_3 [0] : vector<5x1xf32> to vector<1xf32>
    %12 = vector.shape_cast %11 : vector<1xf32> to vector<1x1xf32>
    %13 = arith.mulf %9, %9 : vector<1x20xf32>
    %cst_4 = arith.constant dense<0.000000e+00> : vector<1xf32>
    %14 = vector.multi_reduction <add>, %13, %cst_4 [1] : vector<1x20xf32> to vector<1xf32>
    %15 = vector.shape_cast %14 : vector<1xf32> to vector<1x1xf32>
    %cst_5 = arith.constant 9.99999996E-13 : f32
    %16 = vector.broadcast %cst_5 : f32 to vector<1x1xf32>
    %17 = arith.maximumf %12, %16 : vector<1x1xf32>
    %18 = arith.divf %15, %17 : vector<1x1xf32>
    %19 = math.rsqrt %18 : vector<1x1xf32>
    %c8 = arith.constant 8 : index
    %c0_6 = arith.constant 0 : index
    %20 = vector.load %arg1[%c8, %c0_6] : memref<88x128xf32, #tpu.memory_space<vmem>>, vector<20x20xf32>
    %c81 = arith.constant 81 : index
    %c0_7 = arith.constant 0 : index
    %21 = vector.load %arg1[%c81, %c0_7] : memref<88x128xf32, #tpu.memory_space<vmem>>, vector<1x20xf32>
    %22 = vector.broadcast %21 : vector<1x20xf32> to vector<20x20xf32>
    %23 = arith.mulf %20, %22 : vector<20x20xf32>
    %cst_8 = arith.constant dense<0.000000e+00> : vector<20xf32>
    %24 = vector.multi_reduction <add>, %23, %cst_8 [1] : vector<20x20xf32> to vector<20xf32>
    %25 = vector.shape_cast %24 : vector<20xf32> to vector<20x1xf32>
    %26 = vector.broadcast %25 : vector<20x1xf32> to vector<20x20xf32>
    %27 = arith.mulf %20, %26 : vector<20x20xf32>
    %cst_9 = arith.constant dense<0.000000e+00> : vector<20xf32>
    %28 = vector.multi_reduction <add>, %27, %cst_9 [0] : vector<20x20xf32> to vector<20xf32>
    %29 = vector.shape_cast %28 : vector<20xf32> to vector<1x20xf32>
    %30 = arith.mulf %25, %25 : vector<20x1xf32>
    %cst_10 = arith.constant dense<0.000000e+00> : vector<1xf32>
    %31 = vector.multi_reduction <add>, %30, %cst_10 [0] : vector<20x1xf32> to vector<1xf32>
    %32 = vector.shape_cast %31 : vector<1xf32> to vector<1x1xf32>
    %33 = arith.mulf %29, %29 : vector<1x20xf32>
    %cst_11 = arith.constant dense<0.000000e+00> : vector<1xf32>
    %34 = vector.multi_reduction <add>, %33, %cst_11 [1] : vector<1x20xf32> to vector<1xf32>
    %35 = vector.shape_cast %34 : vector<1xf32> to vector<1x1xf32>
    %cst_12 = arith.constant 9.99999996E-13 : f32
    %36 = vector.broadcast %cst_12 : f32 to vector<1x1xf32>
    %37 = arith.maximumf %32, %36 : vector<1x1xf32>
    %38 = arith.divf %35, %37 : vector<1x1xf32>
    %39 = math.rsqrt %38 : vector<1x1xf32>
    %40 = arith.mulf %19, %39 : vector<1x1xf32>
    %c32 = arith.constant 32 : index
    %c0_13 = arith.constant 0 : index
    %41 = vector.load %arg1[%c32, %c0_13] : memref<88x128xf32, #tpu.memory_space<vmem>>, vector<20x20xf32>
    %c82 = arith.constant 82 : index
    %c0_14 = arith.constant 0 : index
    %42 = vector.load %arg1[%c82, %c0_14] : memref<88x128xf32, #tpu.memory_space<vmem>>, vector<1x20xf32>
    %43 = vector.broadcast %42 : vector<1x20xf32> to vector<20x20xf32>
    %44 = arith.mulf %41, %43 : vector<20x20xf32>
    %cst_15 = arith.constant dense<0.000000e+00> : vector<20xf32>
    %45 = vector.multi_reduction <add>, %44, %cst_15 [1] : vector<20x20xf32> to vector<20xf32>
    %46 = vector.shape_cast %45 : vector<20xf32> to vector<20x1xf32>
    %47 = vector.broadcast %46 : vector<20x1xf32> to vector<20x20xf32>
    %48 = arith.mulf %41, %47 : vector<20x20xf32>
    %cst_16 = arith.constant dense<0.000000e+00> : vector<20xf32>
    %49 = vector.multi_reduction <add>, %48, %cst_16 [0] : vector<20x20xf32> to vector<20xf32>
    %50 = vector.shape_cast %49 : vector<20xf32> to vector<1x20xf32>
    %51 = arith.mulf %46, %46 : vector<20x1xf32>
    %cst_17 = arith.constant dense<0.000000e+00> : vector<1xf32>
    %52 = vector.multi_reduction <add>, %51, %cst_17 [0] : vector<20x1xf32> to vector<1xf32>
    %53 = vector.shape_cast %52 : vector<1xf32> to vector<1x1xf32>
    %54 = arith.mulf %50, %50 : vector<1x20xf32>
    %cst_18 = arith.constant dense<0.000000e+00> : vector<1xf32>
    %55 = vector.multi_reduction <add>, %54, %cst_18 [1] : vector<1x20xf32> to vector<1xf32>
    %56 = vector.shape_cast %55 : vector<1xf32> to vector<1x1xf32>
    %cst_19 = arith.constant 9.99999996E-13 : f32
    %57 = vector.broadcast %cst_19 : f32 to vector<1x1xf32>
    %58 = arith.maximumf %53, %57 : vector<1x1xf32>
    %59 = arith.divf %56, %58 : vector<1x1xf32>
    %60 = math.rsqrt %59 : vector<1x1xf32>
    %61 = arith.mulf %40, %60 : vector<1x1xf32>
    %c56 = arith.constant 56 : index
    %c0_20 = arith.constant 0 : index
    %62 = vector.load %arg1[%c56, %c0_20] : memref<88x128xf32, #tpu.memory_space<vmem>>, vector<20x1xf32>
    %c83 = arith.constant 83 : index
    %c0_21 = arith.constant 0 : index
    %63 = vector.load %arg1[%c83, %c0_21] : memref<88x128xf32, #tpu.memory_space<vmem>>, vector<1x1xf32>
    %64 = vector.broadcast %63 : vector<1x1xf32> to vector<20x1xf32>
    %65 = arith.mulf %62, %64 : vector<20x1xf32>
    %cst_22 = arith.constant dense<0.000000e+00> : vector<20xf32>
    %66 = vector.multi_reduction <add>, %65, %cst_22 [1] : vector<20x1xf32> to vector<20xf32>
    %67 = vector.shape_cast %66 : vector<20xf32> to vector<20x1xf32>
    %68 = arith.mulf %62, %67 : vector<20x1xf32>
    %cst_23 = arith.constant dense<0.000000e+00> : vector<1xf32>
    %69 = vector.multi_reduction <add>, %68, %cst_23 [0] : vector<20x1xf32> to vector<1xf32>
    %70 = vector.shape_cast %69 : vector<1xf32> to vector<1x1xf32>
    %71 = arith.mulf %67, %67 : vector<20x1xf32>
    %cst_24 = arith.constant dense<0.000000e+00> : vector<1xf32>
    %72 = vector.multi_reduction <add>, %71, %cst_24 [0] : vector<20x1xf32> to vector<1xf32>
    %73 = vector.shape_cast %72 : vector<1xf32> to vector<1x1xf32>
    %74 = arith.mulf %70, %70 : vector<1x1xf32>
    %cst_25 = arith.constant dense<0.000000e+00> : vector<1xf32>
    %75 = vector.multi_reduction <add>, %74, %cst_25 [1] : vector<1x1xf32> to vector<1xf32>
    %76 = vector.shape_cast %75 : vector<1xf32> to vector<1x1xf32>
    %cst_26 = arith.constant 9.99999996E-13 : f32
    %77 = vector.broadcast %cst_26 : f32 to vector<1x1xf32>
    %78 = arith.maximumf %73, %77 : vector<1x1xf32>
    %79 = arith.divf %76, %78 : vector<1x1xf32>
    %80 = math.rsqrt %79 : vector<1x1xf32>
    %81 = arith.mulf %61, %80 : vector<1x1xf32>
    %c0_27 = arith.constant 0 : index
    %c0_28 = arith.constant 0 : index
    %82 = vector.load %arg0[%c0_27, %c0_28] : memref<8x5xf32, #tpu.memory_space<vmem>>, vector<8x5xf32>
    %cst_29 = arith.constant dense<0.000000e+00> : vector<8x20xf32>
    %83 = tpu.matmul %82, %0, %cst_29 {dimension_numbers = #tpu.dot_dimension_numbers<[1], [0], [0], [1], [0, 0, 1, 1], [], []>} : vector<8x5xf32>, vector<5x20xf32>, vector<8x20xf32> -> vector<8x20xf32>
    %cst_30 = arith.constant 0.000000e+00 : f32
    %84 = vector.broadcast %cst_30 : f32 to vector<8x20xf32>
    %85 = arith.maximumf %83, %84 : vector<8x20xf32>
    %cst_31 = arith.constant dense<0.000000e+00> : vector<8x20xf32>
    %86 = tpu.matmul %85, %20, %cst_31 {dimension_numbers = #tpu.dot_dimension_numbers<[1], [0], [0], [1], [0, 0, 1, 1], [], []>} : vector<8x20xf32>, vector<20x20xf32>, vector<8x20xf32> -> vector<8x20xf32>
    %cst_32 = arith.constant 0.000000e+00 : f32
    %87 = vector.broadcast %cst_32 : f32 to vector<8x20xf32>
    %88 = arith.maximumf %86, %87 : vector<8x20xf32>
    %cst_33 = arith.constant dense<0.000000e+00> : vector<8x20xf32>
    %89 = tpu.matmul %88, %41, %cst_33 {dimension_numbers = #tpu.dot_dimension_numbers<[1], [0], [0], [1], [0, 0, 1, 1], [], []>} : vector<8x20xf32>, vector<20x20xf32>, vector<8x20xf32> -> vector<8x20xf32>
    %cst_34 = arith.constant 0.000000e+00 : f32
    %90 = vector.broadcast %cst_34 : f32 to vector<8x20xf32>
    %91 = arith.maximumf %89, %90 : vector<8x20xf32>
    %cst_35 = arith.constant dense<0.000000e+00> : vector<8x1xf32>
    %92 = tpu.matmul %91, %62, %cst_35 {dimension_numbers = #tpu.dot_dimension_numbers<[1], [0], [0], [1], [0, 0, 1, 1], [], []>} : vector<8x20xf32>, vector<20x1xf32>, vector<8x1xf32> -> vector<8x1xf32>
    %93 = vector.broadcast %81 : vector<1x1xf32> to vector<8x1xf32>
    %94 = arith.mulf %92, %93 : vector<8x1xf32>
    %c0_36 = arith.constant 0 : index
    %c0_37 = arith.constant 0 : index
    %95 = vector.load %arg2[%c0_36, %c0_37] : memref<8x1xf32, #tpu.memory_space<vmem>>, vector<8x1xf32>
    tpu.vector_store %arg2[%c0_36, %c0_37], %94 {strides = array<i32>} : memref<8x1xf32, #tpu.memory_space<vmem>>, vector<8x1xf32>,
    return
  }
}

</mosaic_0001>

<llo_original>
// kernel: fwd.1
$region0: #{fwd.1}
  #allocation0 [shape = 'u32[]', space=smem, size = 0x4, offset = 0x4, fixed_abs, tag = 'smem constant byte address 0x4 - core index']
  #allocation1 [shape = 'u32[144,128]{1,0:T(1,128)}', space=vmem, size = 0x12000, scoped, tag = 'internal scratch']
  %s0 = inlined_call_operand.hbm [shape: f32[8,5], index: 0, kind: input, shape index: {}]
  %s1 = inlined_call_operand.hbm [shape: f32[88,128], index: 1, kind: input, shape index: {}]
  %s2 = inlined_call_operand.vmem [shape: f32[8,1], index: 2, kind: output, shape index: {}]
  %s3 = sld [smem:[#allocation0]]
  $region26: #{fwd.1} parent=0
    _
  %s5 = ssub.s32 1, %s3
  %s6 = scalar_select 0, %s5, %s3
  $region1: #{fwd.1} parent=0
    #allocation2 [shape = 'u8[4096]{0}', space=vmem, size = 0x1000, scoped, tag = 'input window, operand 0, single buffered']
    #allocation3 [shape = 's32[1]{0}', space=sflag, size = 0x4, scoped, tag = 'scoped memory for fwd.1']
    #allocation4 [shape = 'u8[45056]{0}', space=vmem, size = 0xb000, scoped, tag = 'input window, operand 1, single buffered']
    #allocation5 [shape = 's32[1]{0}', space=sflag, size = 0x4, scoped, tag = 'scoped memory for fwd.1']
    %7 = vsyncpa [#allocation3], 0
    %8 = vsyncpa [#allocation5], 0
    // Predicated region
    $region2: #{fwd.1} parent=1 // pred_check
      _
    $region3: #{fwd.1} parent=1 // pred_check_branch
      %10 = sbr.rel (0) target = $region5
    $region4: #{fwd.1} parent=1 // pred_region
      %s12 = ssub.s32 128, 128
      %13 = vsyncadd [#allocation3], %s12
      %s15 = sshll.u32 [#allocation2], 4
      %s16 = int_to_ptr.vmem [resolvable:$true] %s15
      %18 = dma.hbm_to_vmem [thread:$0]  %s0, 128, %s16, [#allocation3]
    $region5: #{fwd.1} parent=1 // pred_fallthru
      _
    // Predicated region
    $region6: #{fwd.1} parent=1 // pred_check
      _
    $region7: #{fwd.1} parent=1 // pred_check_branch
      %20 = sbr.rel (0) target = $region9
    $region8: #{fwd.1} parent=1 // pred_region
      %s22 = ssub.s32 1408, 1408
      %23 = vsyncadd [#allocation5], %s22
      %s24 = sshll.u32 [#allocation4], 4
      %s25 = int_to_ptr.vmem [resolvable:$true] %s24
      %30 = dma.hbm_to_vmem [thread:$0]  %s1, 1408, %s25, [#allocation5], 128, 128, 8
    $region9: #{fwd.1} parent=1 // pred_fallthru
      _
    // Predicated region
    $region10: #{fwd.1} parent=1 // pred_check
      _
    $region11: #{fwd.1} parent=1 // pred_check_branch
      %32 = sbr.rel (0) target = $region13
    $region12: #{fwd.1} parent=1 // pred_region
      %33 = dma.done [#allocation3], 128
    $region13: #{fwd.1} parent=1 // pred_fallthru
      _
    // Predicated region
    $region14: #{fwd.1} parent=1 // pred_check
      _
    $region15: #{fwd.1} parent=1 // pred_check_branch
      %35 = sbr.rel (0) target = $region17
    $region16: #{fwd.1} parent=1 // pred_region
      %36 = dma.done [#allocation5], 1408
    $region17: #{fwd.1} parent=1 // pred_fallthru
      _
    %v37 = vld [vmem:[#allocation4] sm:$0x1f]
    %v38 = vld [vmem:[#allocation4 + $0x50] sm:$0x1]
    %v39 = vlaneseq
    %v40 = vshrl.u32 %v39, 7
    %v41 = vsub.s32 0, %v40
    %v42 = vrot.slane %v38, %v41
    %v43 = vmul.f32 %v37, %v42
    %vm44 = vcmask 159744
    %v45 = vsel %vm44, %v43, 0.0
    %46 = vadd.xlane.f32.xlu0 %v45
    %v47 = vpop.xlane.xlu0 %46
    %v48 = vmul.f32 %v37, %v47
    %v49 = vsel %vm44, %v48, 0.0
    %v50 = vrot.slane %v49, 4
    %v51 = vadd.f32 %v49, %v50
    %v52 = vrot.slane %v51, 2
    %v53 = vadd.f32 %v51, %v52
    %v54 = vrot.slane %v53, 1
    %v55 = vadd.f32 %v53, %v54
    %v56 = vmul.f32 %v47, %v47
    %vm57 = vcmask 1044480
    %v58 = vsel %vm57, %v56, 0.0
    %v59 = vrot.slane %v58, 4
    %v60 = vadd.f32 %v58, %v59
    %v61 = vrot.slane %v60, 2
    %v62 = vadd.f32 %v60, %v61
    %v63 = vrot.slane %v62, 1
    %v64 = vadd.f32 %v62, %v63
    %v65 = vmul.f32 %v55, %v55
    %vm66 = vcmask 162816
    %v67 = vsel %vm66, %v65, 0.0
    %68 = vadd.xlane.f32.xlu0 %v67
    %v69 = vpop.xlane.xlu0 %68
    %v70 = vmax.f32 %v64, 1e-12
    %v71 = vrcp.pop %v70
    %v72 = vmul.f32 %v69, %v71
    %v73 = vrsqrt.pop %v72
    %v74 = vld [vmem:[#allocation4 + $0x8] sm:$0xff]
    %v75 = vld [vmem:[#allocation4 + $0x10] sm:$0xff]
    %v76 = vld [vmem:[#allocation4 + $0x18] sm:$0xf]
    %v77 = vld [vmem:[#allocation4 + $0x51] sm:$0x1]
    %v78 = vlaneseq
    %v79 = vshrl.u32 %v78, 7
    %v80 = vsub.s32 0, %v79
    %v81 = vrot.slane %v77, %v80
    %v82 = vmul.f32 %v74, %v81
    %v83 = vmul.f32 %v75, %v81
    %v84 = vmul.f32 %v76, %v81
    %v85 = vsel %vm66, %v82, 0.0
    %86 = vadd.xlane.f32.xlu0 %v85
    %v87 = vpop.xlane.xlu0 %86
    %v88 = vsel %vm66, %v83, 0.0
    %89 = vadd.xlane.f32.xlu0 %v88
    %v90 = vpop.xlane.xlu0 %89
    %vm91 = vcmask 158720
    %v92 = vsel %vm91, %v84, 0.0
    %93 = vadd.xlane.f32.xlu0 %v92
    %v94 = vpop.xlane.xlu0 %93
    %v95 = vmul.f32 %v74, %v87
    %v96 = vmul.f32 %v75, %v90
    %v97 = vmul.f32 %v76, %v94
    %v98 = vsel %vm66, %v95, 0.0
    %v99 = vsel %vm66, %v96, 0.0
    %v100 = vadd.f32 %v98, %v99
    %v101 = vsel %vm91, %v97, 0.0
    %v102 = vadd.f32 %v100, %v101
    %v103 = vrot.slane %v102, 4
    %v104 = vadd.f32 %v102, %v103
    %v105 = vrot.slane %v104, 2
    %v106 = vadd.f32 %v104, %v105
    %v107 = vrot.slane %v106, 1
    %v108 = vadd.f32 %v106, %v107
    %v109 = vmul.f32 %v87, %v87
    %v110 = vmul.f32 %v90, %v90
    %v111 = vmul.f32 %v94, %v94
    %v112 = vadd.f32 %v109, %v110
    %vm113 = vcmask 1043456
    %v114 = vsel %vm113, %v111, 0.0
    %v115 = vadd.f32 %v112, %v114
    %v116 = vrot.slane %v115, 4
    %v117 = vadd.f32 %v115, %v116
    %v118 = vrot.slane %v117, 2
    %v119 = vadd.f32 %v117, %v118
    %v120 = vrot.slane %v119, 1
    %v121 = vadd.f32 %v119, %v120
    %v122 = vmul.f32 %v108, %v108
    %v123 = vsel %vm66, %v122, 0.0
    %124 = vadd.xlane.f32.xlu0 %v123
    %v125 = vpop.xlane.xlu0 %124
    %v126 = vmax.f32 %v121, 1e-12
    %v127 = vrcp.pop %v126
    %v128 = vmul.f32 %v125, %v127
    %v129 = vrsqrt.pop %v128
    %v130 = vmul.f32 %v73, %v129
    %v131 = vld [vmem:[#allocation4 + $0x20] sm:$0xff]
    %v132 = vld [vmem:[#allocation4 + $0x28] sm:$0xff]
    %v133 = vld [vmem:[#allocation4 + $0x30] sm:$0xf]
    %v134 = vld [vmem:[#allocation4 + $0x52] sm:$0x1]
    %v135 = vlaneseq
    %v136 = vshrl.u32 %v135, 7
    %v137 = vsub.s32 0, %v136
    %v138 = vrot.slane %v134, %v137
    %v139 = vmul.f32 %v131, %v138
    %v140 = vmul.f32 %v132, %v138
    %v141 = vmul.f32 %v133, %v138
    %v142 = vsel %vm66, %v139, 0.0
    %143 = vadd.xlane.f32.xlu0 %v142
    %v144 = vpop.xlane.xlu0 %143
    %v145 = vsel %vm66, %v140, 0.0
    %146 = vadd.xlane.f32.xlu0 %v145
    %v147 = vpop.xlane.xlu0 %146
    %v148 = vsel %vm91, %v141, 0.0
    %149 = vadd.xlane.f32.xlu0 %v148
    %v150 = vpop.xlane.xlu0 %149
    %v151 = vmul.f32 %v131, %v144
    %v152 = vmul.f32 %v132, %v147
    %v153 = vmul.f32 %v133, %v150
    %v154 = vsel %vm66, %v151, 0.0
    %v155 = vsel %vm66, %v152, 0.0
    %v156 = vadd.f32 %v154, %v155
    %v157 = vsel %vm91, %v153, 0.0
    %v158 = vadd.f32 %v156, %v157
    %v159 = vrot.slane %v158, 4
    %v160 = vadd.f32 %v158, %v159
    %v161 = vrot.slane %v160, 2
    %v162 = vadd.f32 %v160, %v161
    %v163 = vrot.slane %v162, 1
    %v164 = vadd.f32 %v162, %v163
    %v165 = vmul.f32 %v144, %v144
    %v166 = vmul.f32 %v147, %v147
    %v167 = vmul.f32 %v150, %v150
    %v168 = vadd.f32 %v165, %v166
    %v169 = vsel %vm113, %v167, 0.0
    %v170 = vadd.f32 %v168, %v169
    %v171 = vrot.slane %v170, 4
    %v172 = vadd.f32 %v170, %v171
    %v173 = vrot.slane %v172, 2
    %v174 = vadd.f32 %v172, %v173
    %v175 = vrot.slane %v174, 1
    %v176 = vadd.f32 %v174, %v175
    %v177 = vmul.f32 %v164, %v164
    %v178 = vsel %vm66, %v177, 0.0
    %179 = vadd.xlane.f32.xlu0 %v178
    %v180 = vpop.xlane.xlu0 %179
    %v181 = vmax.f32 %v176, 1e-12
    %v182 = vrcp.pop %v181
    %v183 = vmul.f32 %v180, %v182
    %v184 = vrsqrt.pop %v183
    %v185 = vmul.f32 %v130, %v184
    %v186 = vld [vmem:[#allocation4 + $0x38] sm:$0xff]
    %v187 = vld [vmem:[#allocation4 + $0x40] sm:$0xff]
    %v188 = vld [vmem:[#allocation4 + $0x48] sm:$0xf]
    %v189 = vld [vmem:[#allocation4 + $0x53] sm:$0x1]
    %v190 = vlaneseq
    %v191 = vshrl.u32 %v190, 7
    %v192 = vsub.s32 0, %v191
    %v193 = vrot.slane %v189, %v192
    %v194 = vmul.f32 %v186, %v193
    %v195 = vmul.f32 %v187, %v193
    %v196 = vmul.f32 %v188, %v193
    %v197 = vadd.f32 %v194, 0.0
    %v198 = vadd.f32 %v195, 0.0
    %v199 = vadd.f32 %v196, 0.0
    %v200 = vmul.f32 %v186, %v197
    %v201 = vmul.f32 %v187, %v198
    %v202 = vmul.f32 %v188, %v199
    %vm203 = vcmask 7168
    %v204 = vsel %vm203, %v200, 0.0
    %v205 = vsel %vm203, %v201, 0.0
    %v206 = vadd.f32 %v204, %v205
    %vm207 = vcmask 3072
    %v208 = vsel %vm207, %v202, 0.0
    %v209 = vadd.f32 %v206, %v208
    %v210 = vrot.slane %v209, 4
    %v211 = vadd.f32 %v209, %v210
    %v212 = vrot.slane %v211, 2
    %v213 = vadd.f32 %v211, %v212
    %v214 = vrot.slane %v213, 1
    %v215 = vadd.f32 %v213, %v214
    %v216 = vmul.f32 %v197, %v197
    %v217 = vmul.f32 %v198, %v198
    %v218 = vmul.f32 %v199, %v199
    %v219 = vsel %vm203, %v216, 0.0
    %v220 = vsel %vm203, %v217, 0.0
    %v221 = vadd.f32 %v219, %v220
    %v222 = vsel %vm207, %v218, 0.0
    %v223 = vadd.f32 %v221, %v222
    %v224 = vrot.slane %v223, 4
    %v225 = vadd.f32 %v223, %v224
    %v226 = vrot.slane %v225, 2
    %v227 = vadd.f32 %v225, %v226
    %v228 = vrot.slane %v227, 1
    %v229 = vadd.f32 %v227, %v228
    %v230 = vmul.f32 %v215, %v215
    %v231 = vadd.f32 %v230, 0.0
    %v232 = vmax.f32 %v229, 1e-12
    %v233 = vrcp.pop %v232
    %v234 = vmul.f32 %v231, %v233
    %v235 = vrsqrt.pop %v234
    %v236 = vmul.f32 %v185, %v235
    %v237 = vld [vmem:[#allocation2] sm:$0xff]
    %vm238 = vcmask 39936
    %v240 = vsel %vm238, %v237, 0
    %v243 = vsel %vm57, %v37, 0
    %245 = vmatprep.subr.mxu0 0.0
    %246 = vmatpush1.msra.mxu0 0.0
    %247 = vmatprep.subr.mxu0 0.0
    %248 = vmatpush1.msra.mxu0 0.0
    %249 = vmatprep.subr.mxu0 0.0
    %250 = vmatpush1.msra.mxu0 0.0
    %251 = vmatprep.subr.mxu0 0.0
    %252 = vmatpush1.msra.mxu0 0.0
    %253 = vmatprep.subr.mxu0 0.0
    %254 = vmatpush1.msra.mxu0 0.0
    %255 = vmatprep.subr.mxu0 0.0
    %256 = vmatpush1.msra.mxu0 0.0
    %257 = vmatprep.subr.mxu0 0.0
    %258 = vmatpush1.msra.mxu0 0.0
    %259 = vmatprep.subr.mxu0 0.0
    %260 = vmatpush1.msra.mxu0 0.0
    %261 = vmatprep.subr.mxu0 0.0
    %262 = vmatpush1.msra.mxu0 0.0
    %263 = vmatprep.subr.mxu0 0.0
    %264 = vmatpush1.msra.mxu0 0.0
    %265 = vmatprep.subr.mxu0 0.0
    %266 = vmatpush1.msra.mxu0 0.0
    %267 = vmatprep.subr.mxu0 0.0
    %268 = vmatpush1.msra.mxu0 0.0
    %269 = vmatprep.subr.mxu0 0.0
    %270 = vmatpush1.msra.mxu0 0.0
    %271 = vmatprep.subr.mxu0 0.0
    %272 = vmatpush1.msra.mxu0 0.0
    %273 = vmatprep.subr.mxu0 0.0
    %274 = vmatpush1.msra.mxu0 0.0
    %275 = vmatprep.subr.mxu0 0.0
    %276 = vmatpush1.msra.mxu0 %v243
    %277 = vmatprep.subr.mxu0 0.0
    %278 = vmatpush2.msra.mxu0 0.0
    %279 = vmatprep.subr.mxu0 0.0
    %280 = vmatpush2.msra.mxu0 0.0
    %281 = vmatprep.subr.mxu0 0.0
    %282 = vmatpush2.msra.mxu0 0.0
    %283 = vmatprep.subr.mxu0 0.0
    %284 = vmatpush2.msra.mxu0 0.0
    %285 = vmatprep.subr.mxu0 0.0
    %286 = vmatpush2.msra.mxu0 0.0
    %287 = vmatprep.subr.mxu0 0.0
    %288 = vmatpush2.msra.mxu0 0.0
    %289 = vmatprep.subr.mxu0 0.0
    %290 = vmatpush2.msra.mxu0 0.0
    %291 = vmatprep.subr.mxu0 0.0
    %292 = vmatpush2.msra.mxu0 0.0
    %293 = vmatprep.subr.mxu0 0.0
    %294 = vmatpush2.msra.mxu0 0.0
    %295 = vmatprep.subr.mxu0 0.0
    %296 = vmatpush2.msra.mxu0 0.0
    %297 = vmatprep.subr.mxu0 0.0
    %298 = vmatpush2.msra.mxu0 0.0
    %299 = vmatprep.subr.mxu0 0.0
    %300 = vmatpush2.msra.mxu0 0.0
    %301 = vmatprep.subr.mxu0 0.0
    %302 = vmatpush2.msra.mxu0 0.0
    %303 = vmatprep.subr.mxu0 0.0
    %304 = vmatpush2.msra.mxu0 0.0
    %305 = vmatprep.subr.mxu0 0.0
    %306 = vmatpush2.msra.mxu0 0.0
    %307 = vmatprep.subr.mxu0 0.0
    %308 = vmatpush2.msra.mxu0 0.0
    %309 = vmatprep.mubr.f32.mxu0 0.0
    %310 = vmatmul.mubr.f32.gmra.mxu0 %v240
    %v311 = vpop.f32.mrf.mxu0
    %v312 = vadd.f32 0.0, %v311
    %v313 = vpop.f32.mrf.mxu0
    %314 = vdwg.mxu0
    %v315 = vmax.f32 %v312, 0.0
    %v317 = vsel %vm66, %v315, 0
    %v320 = vsel %vm113, %v76, 0
    %322 = vmatprep.subr.mxu0 0.0
    %323 = vmatpush1.msra.mxu0 0.0
    %324 = vmatprep.subr.mxu0 0.0
    %325 = vmatpush1.msra.mxu0 0.0
    %326 = vmatprep.subr.mxu0 0.0
    %327 = vmatpush1.msra.mxu0 0.0
    %328 = vmatprep.subr.mxu0 0.0
    %329 = vmatpush1.msra.mxu0 0.0
    %330 = vmatprep.subr.mxu0 0.0
    %331 = vmatpush1.msra.mxu0 0.0
    %332 = vmatprep.subr.mxu0 0.0
    %333 = vmatpush1.msra.mxu0 0.0
    %334 = vmatprep.subr.mxu0 0.0
    %335 = vmatpush1.msra.mxu0 0.0
    %336 = vmatprep.subr.mxu0 0.0
    %337 = vmatpush1.msra.mxu0 0.0
    %338 = vmatprep.subr.mxu0 0.0
    %339 = vmatpush1.msra.mxu0 0.0
    %340 = vmatprep.subr.mxu0 0.0
    %341 = vmatpush1.msra.mxu0 0.0
    %342 = vmatprep.subr.mxu0 0.0
    %343 = vmatpush1.msra.mxu0 0.0
    %344 = vmatprep.subr.mxu0 0.0
    %345 = vmatpush1.msra.mxu0 0.0
    %346 = vmatprep.subr.mxu0 0.0
    %347 = vmatpush1.msra.mxu0 0.0
    %348 = vmatprep.subr.mxu0 0.0
    %349 = vmatpush1.msra.mxu0 %v320
    %350 = vmatprep.subr.mxu0 0.0
    %351 = vmatpush1.msra.mxu0 %v75
    %352 = vmatprep.subr.mxu0 0.0
    %353 = vmatpush1.msra.mxu0 %v74
    %354 = vmatprep.subr.mxu0 0.0
    %355 = vmatpush2.msra.mxu0 0.0
    %356 = vmatprep.subr.mxu0 0.0
    %357 = vmatpush2.msra.mxu0 0.0
    %358 = vmatprep.subr.mxu0 0.0
    %359 = vmatpush2.msra.mxu0 0.0
    %360 = vmatprep.subr.mxu0 0.0
    %361 = vmatpush2.msra.mxu0 0.0
    %362 = vmatprep.subr.mxu0 0.0
    %363 = vmatpush2.msra.mxu0 0.0
    %364 = vmatprep.subr.mxu0 0.0
    %365 = vmatpush2.msra.mxu0 0.0
    %366 = vmatprep.subr.mxu0 0.0
    %367 = vmatpush2.msra.mxu0 0.0
    %368 = vmatprep.subr.mxu0 0.0
    %369 = vmatpush2.msra.mxu0 0.0
    %370 = vmatprep.subr.mxu0 0.0
    %371 = vmatpush2.msra.mxu0 0.0
    %372 = vmatprep.subr.mxu0 0.0
    %373 = vmatpush2.msra.mxu0 0.0
    %374 = vmatprep.subr.mxu0 0.0
    %375 = vmatpush2.msra.mxu0 0.0
    %376 = vmatprep.subr.mxu0 0.0
    %377 = vmatpush2.msra.mxu0 0.0
    %378 = vmatprep.subr.mxu0 0.0
    %379 = vmatpush2.msra.mxu0 0.0
    %380 = vmatprep.subr.mxu0 0.0
    %381 = vmatpush2.msra.mxu0 0.0
    %382 = vmatprep.subr.mxu0 0.0
    %383 = vmatpush2.msra.mxu0 0.0
    %384 = vmatprep.subr.mxu0 0.0
    %385 = vmatpush2.msra.mxu0 0.0
    %386 = vmatprep.mubr.f32.mxu0 0.0
    %387 = vmatmul.mubr.f32.gmra.mxu0 %v317
    %v388 = vpop.f32.mrf.mxu0
    %v389 = vadd.f32 0.0, %v388
    %v390 = vpop.f32.mrf.mxu0
    %391 = vdwg.mxu0
    %v392 = vmax.f32 %v389, 0.0
    %v394 = vsel %vm66, %v392, 0
    %v397 = vsel %vm113, %v133, 0
    %399 = vmatprep.subr.mxu0 0.0
    %400 = vmatpush1.msra.mxu0 0.0
    %401 = vmatprep.subr.mxu0 0.0
    %402 = vmatpush1.msra.mxu0 0.0
    %403 = vmatprep.subr.mxu0 0.0
    %404 = vmatpush1.msra.mxu0 0.0
    %405 = vmatprep.subr.mxu0 0.0
    %406 = vmatpush1.msra.mxu0 0.0
    %407 = vmatprep.subr.mxu0 0.0
    %408 = vmatpush1.msra.mxu0 0.0
    %409 = vmatprep.subr.mxu0 0.0
    %410 = vmatpush1.msra.mxu0 0.0
    %411 = vmatprep.subr.mxu0 0.0
    %412 = vmatpush1.msra.mxu0 0.0
    %413 = vmatprep.subr.mxu0 0.0
    %414 = vmatpush1.msra.mxu0 0.0
    %415 = vmatprep.subr.mxu0 0.0
    %416 = vmatpush1.msra.mxu0 0.0
    %417 = vmatprep.subr.mxu0 0.0
    %418 = vmatpush1.msra.mxu0 0.0
    %419 = vmatprep.subr.mxu0 0.0
    %420 = vmatpush1.msra.mxu0 0.0
    %421 = vmatprep.subr.mxu0 0.0
    %422 = vmatpush1.msra.mxu0 0.0
    %423 = vmatprep.subr.mxu0 0.0
    %424 = vmatpush1.msra.mxu0 0.0
    %425 = vmatprep.subr.mxu0 0.0
    %426 = vmatpush1.msra.mxu0 %v397
    %427 = vmatprep.subr.mxu0 0.0
    %428 = vmatpush1.msra.mxu0 %v132
    %429 = vmatprep.subr.mxu0 0.0
    %430 = vmatpush1.msra.mxu0 %v131
    %431 = vmatprep.subr.mxu0 0.0
    %432 = vmatpush2.msra.mxu0 0.0
    %433 = vmatprep.subr.mxu0 0.0
    %434 = vmatpush2.msra.mxu0 0.0
    %435 = vmatprep.subr.mxu0 0.0
    %436 = vmatpush2.msra.mxu0 0.0
    %437 = vmatprep.subr.mxu0 0.0
    %438 = vmatpush2.msra.mxu0 0.0
    %439 = vmatprep.subr.mxu0 0.0
    %440 = vmatpush2.msra.mxu0 0.0
    %441 = vmatprep.subr.mxu0 0.0
    %442 = vmatpush2.msra.mxu0 0.0
    %443 = vmatprep.subr.mxu0 0.0
    %444 = vmatpush2.msra.mxu0 0.0
    %445 = vmatprep.subr.mxu0 0.0
    %446 = vmatpush2.msra.mxu0 0.0
    %447 = vmatprep.subr.mxu0 0.0
    %448 = vmatpush2.msra.mxu0 0.0
    %449 = vmatprep.subr.mxu0 0.0
    %450 = vmatpush2.msra.mxu0 0.0
    %451 = vmatprep.subr.mxu0 0.0
    %452 = vmatpush2.msra.mxu0 0.0
    %453 = vmatprep.subr.mxu0 0.0
    %454 = vmatpush2.msra.mxu0 0.0
    %455 = vmatprep.subr.mxu0 0.0
    %456 = vmatpush2.msra.mxu0 0.0
    %457 = vmatprep.subr.mxu0 0.0
    %458 = vmatpush2.msra.mxu0 0.0
    %459 = vmatprep.subr.mxu0 0.0
    %460 = vmatpush2.msra.mxu0 0.0
    %461 = vmatprep.subr.mxu0 0.0
    %462 = vmatpush2.msra.mxu0 0.0
    %463 = vmatprep.mubr.f32.mxu0 0.0
    %464 = vmatmul.mubr.f32.gmra.mxu0 %v394
    %v465 = vpop.f32.mrf.mxu0
    %v466 = vadd.f32 0.0, %v465
    %v467 = vpop.f32.mrf.mxu0
    %468 = vdwg.mxu0
    %v469 = vmax.f32 %v466, 0.0
    %v471 = vsel %vm66, %v469, 0
    %v474 = vsel %vm113, %v188, 0
    %476 = vmatprep.subr.mxu0 0.0
    %477 = vmatpush1.msra.mxu0 0.0
    %478 = vmatprep.subr.mxu0 0.0
    %479 = vmatpush1.msra.mxu0 0.0
    %480 = vmatprep.subr.mxu0 0.0
    %481 = vmatpush1.msra.mxu0 0.0
    %482 = vmatprep.subr.mxu0 0.0
    %483 = vmatpush1.msra.mxu0 0.0
    %484 = vmatprep.subr.mxu0 0.0
    %485 = vmatpush1.msra.mxu0 0.0
    %486 = vmatprep.subr.mxu0 0.0
    %487 = vmatpush1.msra.mxu0 0.0
    %488 = vmatprep.subr.mxu0 0.0
    %489 = vmatpush1.msra.mxu0 0.0
    %490 = vmatprep.subr.mxu0 0.0
    %491 = vmatpush1.msra.mxu0 0.0
    %492 = vmatprep.subr.mxu0 0.0
    %493 = vmatpush1.msra.mxu0 0.0
    %494 = vmatprep.subr.mxu0 0.0
    %495 = vmatpush1.msra.mxu0 0.0
    %496 = vmatprep.subr.mxu0 0.0
    %497 = vmatpush1.msra.mxu0 0.0
    %498 = vmatprep.subr.mxu0 0.0
    %499 = vmatpush1.msra.mxu0 0.0
    %500 = vmatprep.subr.mxu0 0.0
    %501 = vmatpush1.msra.mxu0 0.0
    %502 = vmatprep.subr.mxu0 0.0
    %503 = vmatpush1.msra.mxu0 %v474
    %504 = vmatprep.subr.mxu0 0.0
    %505 = vmatpush1.msra.mxu0 %v187
    %506 = vmatprep.subr.mxu0 0.0
    %507 = vmatpush1.msra.mxu0 %v186
    %508 = vmatprep.subr.mxu0 0.0
    %509 = vmatpush2.msra.mxu0 0.0
    %510 = vmatprep.subr.mxu0 0.0
    %511 = vmatpush2.msra.mxu0 0.0
    %512 = vmatprep.subr.mxu0 0.0
    %513 = vmatpush2.msra.mxu0 0.0
    %514 = vmatprep.subr.mxu0 0.0
    %515 = vmatpush2.msra.mxu0 0.0
    %516 = vmatprep.subr.mxu0 0.0
    %517 = vmatpush2.msra.mxu0 0.0
    %518 = vmatprep.subr.mxu0 0.0
    %519 = vmatpush2.msra.mxu0 0.0
    %520 = vmatprep.subr.mxu0 0.0
    %521 = vmatpush2.msra.mxu0 0.0
    %522 = vmatprep.subr.mxu0 0.0
    %523 = vmatpush2.msra.mxu0 0.0
    %524 = vmatprep.subr.mxu0 0.0
    %525 = vmatpush2.msra.mxu0 0.0
    %526 = vmatprep.subr.mxu0 0.0
    %527 = vmatpush2.msra.mxu0 0.0
    %528 = vmatprep.subr.mxu0 0.0
    %529 = vmatpush2.msra.mxu0 0.0
    %530 = vmatprep.subr.mxu0 0.0
    %531 = vmatpush2.msra.mxu0 0.0
    %532 = vmatprep.subr.mxu0 0.0
    %533 = vmatpush2.msra.mxu0 0.0
    %534 = vmatprep.subr.mxu0 0.0
    %535 = vmatpush2.msra.mxu0 0.0
    %536 = vmatprep.subr.mxu0 0.0
    %537 = vmatpush2.msra.mxu0 0.0
    %538 = vmatprep.subr.mxu0 0.0
    %539 = vmatpush2.msra.mxu0 0.0
    %540 = vmatprep.mubr.f32.mxu0 0.0
    %541 = vmatmul.mubr.f32.gmra.mxu0 %v471
    %v542 = vpop.f32.mrf.mxu0
    %v543 = vadd.f32 0.0, %v542
    %v544 = vpop.f32.mrf.mxu0
    %545 = vdwg.mxu0
    %v546 = vmul.f32 %v543, %v236
    %547 = vst.msk [vmem:[%s2] sm:$0xff] %vm203, %v546
    // Predicated region
    $region18: #{fwd.1} parent=1 // pred_check
      _
    $region19: #{fwd.1} parent=1 // pred_check_branch
      %549 = sbr.rel (0) target = $region21
    $region20: #{fwd.1} parent=1 // pred_region
      _
    $region21: #{fwd.1} parent=1 // pred_fallthru
      _
    // Predicated region
    $region22: #{fwd.1} parent=1 // pred_check
      _
    $region23: #{fwd.1} parent=1 // pred_check_branch
      %551 = sbr.rel (0) target = $region25
    $region24: #{fwd.1} parent=1 // pred_region
      _
    $region25: #{fwd.1} parent=1 // pred_fallthru
      _
    %552 = vsyncpa [#allocation3], 1
    %553 = vsyncpa [#allocation5], 1

</llo_original>
